<compile_context>
chip_gen: v5e
topology: v5e:2x2
jax: 0.10.0
libtpu: 0.0.40
codegen_flags: <defaults>
</compile_context>

<pallas_src>
import functools

import jax
import jax.numpy as jnp
from jax import lax
from jax.experimental import pallas as pl
from jax.experimental.pallas import tpu as pltpu

LANE = 128


def _cdiv(a, b):
    return -(-a // b)


def _num_tensorcores_per_chip():
    """Best-effort TensorCore-per-chip detection; defaults to 1 (always safe)."""
    try:
        info = pltpu.get_tpu_info()
    except Exception:
        return 1
    for attr in ("num_cores", "num_tensorcores", "tensorcore_count",
                 "num_cores_per_chip", "cores_per_chip"):
        val = getattr(info, attr, None)
        try:
            val = int(val)
        except (TypeError, ValueError):
            continue
        if val >= 1:
            return val
    # v7x has 2 TensorCores per chip.
    ver = str(getattr(info, "chip_version", "")).lower()
    if "v7" in ver or "7x" in ver:
        return 2
    return 1


def _multiloss_kernel(p_ref, t_ref, out_ref, acc_ref, *,
                      block_rows, fold, blocks_per_shard, total_rows):
    c = pl.program_id(0)          # core-shard index
    i = pl.program_id(1)          # block index within the shard

    @pl.when(i == 0)
    def _():
        acc_ref[...] = jnp.zeros_like(acc_ref)

    t_native = t_ref[...]                       # mask computed in native dtype
    diff = p_ref[...].astype(jnp.float32) - t_native.astype(jnp.float32)
    contrib = jnp.where(t_native != 0, diff * diff, jnp.float32(0.0))

    def _fold(x):
        # (block_rows, 128) -> (fold, 128).  The reshape keeps the minor
        # (8, 128) tile intact, so it is layout-free; `fold` independent
        # accumulator rows keep the add chain short.
        return x.reshape(block_rows // fold, fold, LANE).sum(axis=0)

    global_block = c * blocks_per_shard + i
    # Only the ragged last block (rows % block_rows != 0) and the clamped
    # duplicate blocks of an over-provisioned shard need the row mask; keep
    # the iota/compare VALU work off the hot path for interior blocks.
    needs_mask = (global_block + 1) * block_rows > total_rows

    @pl.when(jnp.logical_not(needs_mask))
    def _():
        acc_ref[...] += _fold(contrib)

    @pl.when(needs_mask)
    def _():
        row_in_block = lax.broadcasted_iota(jnp.int32, (block_rows, LANE), 0)
        valid = global_block * block_rows + row_in_block < total_rows
        acc_ref[...] += _fold(jnp.where(valid, contrib, jnp.float32(0.0)))

    @pl.when(i == pl.num_programs(1) - 1)
    def _():
        out_ref[...] = acc_ref[...].reshape(1, fold, LANE)


def multi_loss(predict, target, *, block_rows=8192):
    """Masked-MSE mean loss (matches the PyTorch MultiLoss forward)."""
    assert predict.shape == target.shape, (
        f"target size {target.shape} != input size {predict.shape}")
    n_elems = predict.size
    if n_elems == 0:
        return jnp.float32(float("nan"))        # torch.mean of an empty tensor

    flat_p = predict.reshape(-1)
    flat_t = target.reshape(-1)

    rows = n_elems // LANE
    n_bulk = rows * LANE

    total = jnp.float32(0.0)

    if rows > 0:
        # No jnp.pad: the bulk streams through the kernel; any <128-element
        # lane tail is handled below in plain JAX.
        p2 = flat_p[:n_bulk].reshape(rows, LANE)
        t2 = flat_t[:n_bulk].reshape(rows, LANE)

        # Tile sizing: big lane-dense tiles (8192 rows = 4 MiB f32 per input
        # per buffer) amortize the ~0.35 us per-grid-step overhead; clamp for
        # small inputs.  `fold` is the resident accumulator height.
        if rows >= 64:
            br = max(64, min((int(block_rows) // 64) * 64, (rows // 64) * 64))
            fold = 64
        elif rows >= 8:
            br = (rows // 8) * 8
            fold = 8
        else:
            br = rows
            fold = rows

        n_blocks = _cdiv(rows, br)
        num_shards = max(1, min(_num_tensorcores_per_chip(), n_blocks))
        blocks_per_shard = _cdiv(n_blocks, num_shards)

        def in_index_map(c, i):
            # Clamp so DMAs always target a real block; the kernel's row mask
            # zeroes the logically out-of-range rows of duplicate blocks.
            return (jnp.minimum(c * blocks_per_shard + i, n_blocks - 1), 0)

        kernel = functools.partial(
            _multiloss_kernel,
            block_rows=br,
            fold=fold,
            blocks_per_shard=blocks_per_shard,
            total_rows=rows,
        )

        if num_shards > 1:
            # Shard the streaming sweep across TensorCores (v7x).
            dim_sem = (pltpu.CORE_PARALLEL, pltpu.ARBITRARY)
        else:
            dim_sem = ("arbitrary", "arbitrary")

        p_isz = jnp.dtype(p2.dtype).itemsize
        t_isz = jnp.dtype(t2.dtype).itemsize
        pipeline_bytes = 2 * 2 * br * LANE * max(p_isz, t_isz)  # 2 in x 2 bufs
        vmem_limit = int(min(64 << 20, max(32 << 20, pipeline_bytes + (4 << 20))))

        cost = pl.CostEstimate(
            flops=5 * n_bulk,
            transcendentals=0,
            bytes_accessed=n_bulk * (p_isz + t_isz)
                           + num_shards * fold * LANE * 4,
        )

        out = pl.pallas_call(
            kernel,
            out_shape=jax.ShapeDtypeStruct((num_shards, fold, LANE),
                                           jnp.float32),
            grid_spec=pltpu.PrefetchScalarGridSpec(
                num_scalar_prefetch=0,
                grid=(num_shards, blocks_per_shard),
                in_specs=[
                    pl.BlockSpec((br, LANE), in_index_map),
                    pl.BlockSpec((br, LANE), in_index_map),
                ],
                out_specs=pl.BlockSpec((1, fold, LANE), lambda c, i: (c, 0, 0)),
                scratch_shapes=[pltpu.VMEM((fold, LANE), jnp.float32)],
            ),
            compiler_params=pltpu.CompilerParams(
                dimension_semantics=dim_sem,
                vmem_limit_bytes=vmem_limit),
            cost_estimate=cost,
        )(p2, t2)

        total = total + jnp.sum(out)

    if n_bulk < n_elems:
        # Lane tail (< 128 elements): trivial in plain JAX, avoids an extra
        # padding pass over the full inputs.
        tp = flat_p[n_bulk:]
        tt = flat_t[n_bulk:]
        d = tp.astype(jnp.float32) - tt.astype(jnp.float32)
        total = total + jnp.sum(jnp.where(tt != 0, d * d, jnp.float32(0.0)))

    # Mean over ALL elements (matches torch.mean over the full tensor).
    return total / jnp.float32(n_elems)


def _reference(predict, target):
    loss_mse = (predict.astype(jnp.float32) - target.astype(jnp.float32)) ** 2
    w = jnp.where(target == 0, 0.0, 1.0)
    return jnp.mean(loss_mse * w)


if __name__ == "__main__":
    # Case 1: small NCHW-like shape (lane-aligned, single full block).
    k1, k2, k3 = jax.random.split(jax.random.PRNGKey(0), 3)
    B, C, H, W = 2, 4, 16, 16
    predict = jax.random.normal(k1, (B, C, H, W), dtype=jnp.float32)
    target = jax.random.normal(k2, (B, C, H, W), dtype=jnp.float32)
    zero_mask = jax.random.bernoulli(k3, p=0.3, shape=(B, C, H, W))
    target = jnp.where(zero_mask, jnp.zeros_like(target), target)
    loss = jax.block_until_ready(multi_loss(predict, target))
    ref = _reference(predict, target)
    assert jnp.allclose(loss, ref, rtol=1e-5, atol=1e-6), (loss, ref)

    # Case 2: ragged row count (exercises the masked edge-block path).
    k4, k5, k6 = jax.random.split(jax.random.PRNGKey(1), 3)
    p2 = jax.random.normal(k4, (9, 128), dtype=jnp.float32)
    t2 = jax.random.normal(k5, (9, 128), dtype=jnp.float32)
    t2 = jnp.where(jax.random.bernoulli(k6, p=0.4, shape=t2.shape),
                   jnp.zeros_like(t2), t2)
    loss2 = jax.block_until_ready(multi_loss(p2, t2))
    ref2 = _reference(p2, t2)
    assert jnp.allclose(loss2, ref2, rtol=1e-5, atol=1e-6), (loss2, ref2)

    # Case 3: size not a multiple of 128 (exercises the plain-JAX lane tail).
    k7, k8, k9 = jax.random.split(jax.random.PRNGKey(2), 3)
    p3 = jax.random.normal(k7, (2, 300), dtype=jnp.float32)
    t3 = jax.random.normal(k8, (2, 300), dtype=jnp.float32)
    t3 = jnp.where(jax.random.bernoulli(k9, p=0.25, shape=t3.shape),
                   jnp.zeros_like(t3), t3)
    loss3 = jax.block_until_ready(multi_loss(p3, t3))
    ref3 = _reference(p3, t3)
    assert jnp.allclose(loss3, ref3, rtol=1e-5, atol=1e-6), (loss3, ref3)

    print("KERNEL_OK")
</pallas_src>

<mosaic_0001>
module attributes {stable_mosaic.version = 11 : i64} {
  func.func @_multiloss_kernel(%arg0: i32, %arg1: i32, %arg2: memref<16x128xf32, #tpu.memory_space<vmem>>, %arg3: memref<16x128xf32, #tpu.memory_space<vmem>>, %arg4: memref<1x8x128xf32, #tpu.memory_space<vmem>>, %arg5: memref<8x128xf32, #tpu.memory_space<vmem>>) attributes {dimension_semantics = [#tpu.dimension_semantics<arbitrary>, #tpu.dimension_semantics<arbitrary>], iteration_bounds = array<i64: 1, 1>, scalar_prefetch = 0 : i64, scratch_operands = 1 : i64, tpu.core_type = #tpu.core_type<tc>, window_params = [{transform_indices = @transform_0, window_bounds = array<i64: 16, 128>}, {transform_indices = @transform_1, window_bounds = array<i64: 16, 128>}, {transform_indices = @transform_2, window_bounds = array<i64: 1, 8, 128>}]} {
    %c0_i32 = arith.constant 0 : i32
    %0 = arith.cmpi eq, %arg1, %c0_i32 : i32
    %1 = arith.extui %0 : i1 to i32
    %c0_i32_0 = arith.constant 0 : i32
    %2 = arith.cmpi ne, %1, %c0_i32_0 : i32
    scf.if %2 {
      %cst_11 = arith.constant 0.000000e+00 : f32
      %24 = vector.broadcast %cst_11 : f32 to vector<8x128xf32>
      %c0_12 = arith.constant 0 : index
      %c0_13 = arith.constant 0 : index
      %25 = vector.load %arg5[%c0_12, %c0_13] : memref<8x128xf32, #tpu.memory_space<vmem>>, vector<8x128xf32>
      tpu.vector_store %arg5[%c0_12, %c0_13], %24 {strides = array<i32>} : memref<8x128xf32, #tpu.memory_space<vmem>>, vector<8x128xf32>,
    } else {
    }
    %c0 = arith.constant 0 : index
    %c0_1 = arith.constant 0 : index
    %3 = vector.load %arg3[%c0, %c0_1] : memref<16x128xf32, #tpu.memory_space<vmem>>, vector<16x128xf32>
    %c0_2 = arith.constant 0 : index
    %c0_3 = arith.constant 0 : index
    %4 = vector.load %arg2[%c0_2, %c0_3] : memref<16x128xf32, #tpu.memory_space<vmem>>, vector<16x128xf32>
    %5 = arith.subf %4, %3 : vector<16x128xf32>
    %cst = arith.constant 0.000000e+00 : f32
    %6 = vector.broadcast %cst : f32 to vector<16x128xf32>
    %7 = arith.cmpf one, %3, %6 : vector<16x128xf32>
    %8 = arith.mulf %5, %5 : vector<16x128xf32>
    %cst_4 = arith.constant 0.000000e+00 : f32
    %9 = vector.broadcast %cst_4 : f32 to vector<16x128xf32>
    %10 = arith.select %7, %8, %9 : vector<16x128xi1>, vector<16x128xf32>
    %c1_i32 = arith.constant 1 : i32
    %11 = arith.muli %arg0, %c1_i32 : i32
    %12 = arith.addi %11, %arg1 : i32
    %c1_i32_5 = arith.constant 1 : i32
    %13 = arith.addi %12, %c1_i32_5 : i32
    %c16_i32 = arith.constant 16 : i32
    %14 = arith.muli %13, %c16_i32 : i32
    %c16_i32_6 = arith.constant 16 : i32
    %15 = arith.cmpi sgt, %14, %c16_i32_6 : i32
    %true = arith.constant true
    %16 = arith.xori %15, %true : i1
    %17 = arith.extui %16 : i1 to i32
    %c0_i32_7 = arith.constant 0 : i32
    %18 = arith.cmpi ne, %17, %c0_i32_7 : i32
    scf.if %18 {
      %c0_11 = arith.constant 0 : index
      %c0_12 = arith.constant 0 : index
      %24 = vector.load %arg5[%c0_11, %c0_12] : memref<8x128xf32, #tpu.memory_space<vmem>>, vector<8x128xf32>
      %25 = vector.shape_cast %10 : vector<16x128xf32> to vector<2x8x128xf32>
      %cst_13 = arith.constant dense<0.000000e+00> : vector<8x128xf32>
      %26 = vector.multi_reduction <add>, %25, %cst_13 [0] : vector<2x8x128xf32> to vector<8x128xf32>
      %27 = arith.addf %24, %26 : vector<8x128xf32>
      %c0_14 = arith.constant 0 : index
      %c0_15 = arith.constant 0 : index
      %28 = vector.load %arg5[%c0_14, %c0_15] : memref<8x128xf32, #tpu.memory_space<vmem>>, vector<8x128xf32>
      tpu.vector_store %arg5[%c0_14, %c0_15], %27 {strides = array<i32>} : memref<8x128xf32, #tpu.memory_space<vmem>>, vector<8x128xf32>,
    } else {
    }
    %19 = arith.extui %15 : i1 to i32
    %c0_i32_8 = arith.constant 0 : i32
    %20 = arith.cmpi ne, %19, %c0_i32_8 : i32
    scf.if %20 {
      %24 = tpu.iota {dimensions = array<i32: 0>} : vector<16x128xi32>
      %c16_i32_11 = arith.constant 16 : i32
      %25 = arith.muli %12, %c16_i32_11 : i32
      %26 = vector.broadcast %25 : i32 to vector<16x128xi32>
      %27 = arith.addi %26, %24 : vector<16x128xi32>
      %c16_i32_12 = arith.constant 16 : i32
      %28 = vector.broadcast %c16_i32_12 : i32 to vector<16x128xi32>
      %29 = arith.cmpi slt, %27, %28 : vector<16x128xi32>
      %c0_13 = arith.constant 0 : index
      %c0_14 = arith.constant 0 : index
      %30 = vector.load %arg5[%c0_13, %c0_14] : memref<8x128xf32, #tpu.memory_space<vmem>>, vector<8x128xf32>
      %cst_15 = arith.constant 0.000000e+00 : f32
      %31 = vector.broadcast %cst_15 : f32 to vector<16x128xf32>
      %32 = arith.select %29, %10, %31 : vector<16x128xi1>, vector<16x128xf32>
      %33 = vector.shape_cast %32 : vector<16x128xf32> to vector<2x8x128xf32>
      %cst_16 = arith.constant dense<0.000000e+00> : vector<8x128xf32>
      %34 = vector.multi_reduction <add>, %33, %cst_16 [0] : vector<2x8x128xf32> to vector<8x128xf32>
      %35 = arith.addf %30, %34 : vector<8x128xf32>
      %c0_17 = arith.constant 0 : index
      %c0_18 = arith.constant 0 : index
      %36 = vector.load %arg5[%c0_17, %c0_18] : memref<8x128xf32, #tpu.memory_space<vmem>>, vector<8x128xf32>
      tpu.vector_store %arg5[%c0_17, %c0_18], %35 {strides = array<i32>} : memref<8x128xf32, #tpu.memory_space<vmem>>, vector<8x128xf32>,
    } else {
    }
    %c0_i32_9 = arith.constant 0 : i32
    %21 = arith.cmpi eq, %arg1, %c0_i32_9 : i32
    %22 = arith.extui %21 : i1 to i32
    %c0_i32_10 = arith.constant 0 : i32
    %23 = arith.cmpi ne, %22, %c0_i32_10 : i32
    scf.if %23 {
      %c0_11 = arith.constant 0 : index
      %c0_12 = arith.constant 0 : index
      %24 = vector.load %arg5[%c0_11, %c0_12] : memref<8x128xf32, #tpu.memory_space<vmem>>, vector<8x128xf32>
      %25 = vector.shape_cast %24 : vector<8x128xf32> to vector<1x8x128xf32>
      %c0_13 = arith.constant 0 : index
      %c0_14 = arith.constant 0 : index
      %c0_15 = arith.constant 0 : index
      %26 = vector.load %arg4[%c0_13, %c0_14, %c0_15] : memref<1x8x128xf32, #tpu.memory_space<vmem>>, vector<1x8x128xf32>
      tpu.vector_store %arg4[%c0_13, %c0_14, %c0_15], %25 {strides = array<i32>} : memref<1x8x128xf32, #tpu.memory_space<vmem>>, vector<1x8x128xf32>,
    } else {
    }
    return
  }
  func.func @transform_0(%arg0: i32, %arg1: i32) -> (i32, i32) {
    %c1_i32 = arith.constant 1 : i32
    %0 = arith.muli %arg0, %c1_i32 : i32
    %1 = arith.addi %0, %arg1 : i32
    %c0_i32 = arith.constant 0 : i32
    %2 = arith.minsi %1, %c0_i32 : i32
    %c0_i32_0 = arith.constant 0 : i32
    %c0_i32_1 = arith.constant 0 : i32
    return %2, %c0_i32_0 : i32, i32
  }
  func.func @transform_1(%arg0: i32, %arg1: i32) -> (i32, i32) {
    %c1_i32 = arith.constant 1 : i32
    %0 = arith.muli %arg0, %c1_i32 : i32
    %1 = arith.addi %0, %arg1 : i32
    %c0_i32 = arith.constant 0 : i32
    %2 = arith.minsi %1, %c0_i32 : i32
    %c0_i32_0 = arith.constant 0 : i32
    %c0_i32_1 = arith.constant 0 : i32
    return %2, %c0_i32_0 : i32, i32
  }
  func.func @transform_2(%arg0: i32, %arg1: i32) -> (i32, i32, i32) {
    %c0_i32 = arith.constant 0 : i32
    %c0_i32_0 = arith.constant 0 : i32
    %c0_i32_1 = arith.constant 0 : i32
    return %arg0, %c0_i32, %c0_i32_0 : i32, i32, i32
  }
}

</mosaic_0001>

<llo_original>
// kernel: tpu_custom_call.1
$region0: #{tpu_custom_call.1}
  #allocation0 [shape = 'u32[]', space=smem, size = 0x4, offset = 0x4, fixed_abs, tag = 'smem constant byte address 0x4 - core index']
  #allocation1 [shape = 'u32[72,128]{1,0:T(1,128)}', space=vmem, size = 0x9000, scoped, tag = 'internal scratch']
  #allocation2 [shape = 'f32[8,128]{1,0:T(8,128)}', space=vmem, size = 0x1000, scoped, tag = 'scratch operand']
  %s0 = inlined_call_operand.hbm [shape: f32[16,128], index: 0, kind: input, shape index: {}]
  %s1 = inlined_call_operand.hbm [shape: f32[16,128], index: 1, kind: input, shape index: {}]
  %s2 = inlined_call_operand.hbm [shape: f32[1,8,128], index: 2, kind: output, shape index: {}]
  %s3 = sld [smem:[#allocation0]]
  $region42: #{tpu_custom_call.1} parent=0
    _
  %s5 = ssub.s32 1, %s3
  %s6 = scalar_select 0, %s5, %s3
  $region1: #{tpu_custom_call.1} parent=0
    #allocation3 [shape = 'u8[8192]{0}', space=vmem, size = 0x2000, scoped, tag = 'input window, operand 0, single buffered']
    #allocation4 [shape = 's32[1]{0}', space=sflag, size = 0x4, scoped, tag = 'scoped memory for tpu_custom_call.1']
    #allocation5 [shape = 's32[1]{0}', space=sflag, size = 0x4, scoped, tag = 'scoped memory for tpu_custom_call.1']
    #allocation6 [shape = 'u8[8192]{0}', space=vmem, size = 0x2000, scoped, tag = 'input window, operand 1, single buffered']
    #allocation7 [shape = 's32[1]{0}', space=sflag, size = 0x4, scoped, tag = 'scoped memory for tpu_custom_call.1']
    #allocation8 [shape = 'u8[4096]{0}', space=vmem, size = 0x1000, scoped, tag = 'output window, operand 0, single buffered']
    %7 = vsyncpa [#allocation4], 0
    %8 = vsyncpa [#allocation7], 0
    %9 = vsyncpa [#allocation5], 0
    // Predicated region
    $region2: #{tpu_custom_call.1} parent=1 // pred_check
      _
    $region3: #{tpu_custom_call.1} parent=1 // pred_check_branch
      %11 = sbr.rel (0) target = $region5
    $region4: #{tpu_custom_call.1} parent=1 // pred_region
      %s12 = sadd.s32 0, 0
      %p13 = scmp.lt.s32.totalorder %s12, 0
      %s14 = scalar_select %p13, %s12, 0
      %s15 = smul.u32 2, %s14
      %17 = vsyncadd [#allocation4], 0
      %s18 = smul.addr %s15, 8
      %s19 = scalar_lea.hbm %s0, %s18
      %s20 = sshll.u32 %s19, 4
      %s21 = int_to_ptr.hbm [resolvable:$true] %s20
      %s22 = sshll.u32 [#allocation3], 4
      %s23 = int_to_ptr.vmem [resolvable:$true] %s22
      %28 = dma.hbm_to_vmem [thread:$0]  %s21, 256, %s23, [#allocation4], 128, 128, 8
    $region5: #{tpu_custom_call.1} parent=1 // pred_fallthru
      _
    // Predicated region
    $region6: #{tpu_custom_call.1} parent=1 // pred_check
      _
    $region7: #{tpu_custom_call.1} parent=1 // pred_check_branch
      %30 = sbr.rel (0) target = $region9
    $region8: #{tpu_custom_call.1} parent=1 // pred_region
      %s31 = sadd.s32 0, 0
      %p32 = scmp.lt.s32.totalorder %s31, 0
      %s33 = scalar_select %p32, %s31, 0
      %s34 = smul.u32 2, %s33
      %36 = vsyncadd [#allocation7], 0
      %s37 = smul.addr %s34, 8
      %s38 = scalar_lea.hbm %s1, %s37
      %s39 = sshll.u32 %s38, 4
      %s40 = int_to_ptr.hbm [resolvable:$true] %s39
      %s41 = sshll.u32 [#allocation6], 4
      %s42 = int_to_ptr.vmem [resolvable:$true] %s41
      %47 = dma.hbm_to_vmem [thread:$0]  %s40, 256, %s42, [#allocation7], 128, 128, 8
    $region9: #{tpu_custom_call.1} parent=1 // pred_fallthru
      _
    // Predicated region
    $region10: #{tpu_custom_call.1} parent=1 // pred_check
      _
    $region11: #{tpu_custom_call.1} parent=1 // pred_check_branch
      %49 = sbr.rel (0) target = $region13
    $region12: #{tpu_custom_call.1} parent=1 // pred_region
      %51 = dma.done [#allocation4], 256
    $region13: #{tpu_custom_call.1} parent=1 // pred_fallthru
      _
    // Predicated region
    $region14: #{tpu_custom_call.1} parent=1 // pred_check
      _
    $region15: #{tpu_custom_call.1} parent=1 // pred_check_branch
      %53 = sbr.rel (0) target = $region17
    $region16: #{tpu_custom_call.1} parent=1 // pred_region
      %55 = dma.done [#allocation7], 256
    $region17: #{tpu_custom_call.1} parent=1 // pred_fallthru
      _
    %s56 = sadd.s32 0, 0
    %p57 = scmp.lt.s32.totalorder %s56, 0
    %s58 = scalar_select %p57, %s56, 0
    %s59 = smul.u32 2, %s58
    %s60 = sadd.s32 0, 0
    %p61 = scmp.lt.s32.totalorder %s60, 0
    %s62 = scalar_select %p61, %s60, 0
    %s63 = smul.u32 2, %s62
    %p64 = scmp.eq.s32.totalorder 0, 0
    // Predicated region
    $region18: #{tpu_custom_call.1} parent=1 // pred_check
      %p65 = pneg %p64
    $region19: #{tpu_custom_call.1} parent=1 // pred_check_branch
      %67 = sbr.rel (%p65) target = $region21
    $region20: #{tpu_custom_call.1} parent=1 // pred_region
      %68 = vst [vmem:[#allocation2] sm:$0xff] 0.0
    $region21: #{tpu_custom_call.1} parent=1 // pred_fallthru
      _
    %v69 = vld [vmem:[#allocation6] sm:$0xff]
    %v70 = vld [vmem:[#allocation6 + $0x8] sm:$0xff]
    %v71 = vld [vmem:[#allocation3] sm:$0xff]
    %v72 = vld [vmem:[#allocation3 + $0x8] sm:$0xff]
    %v73 = vsub.f32 %v71, %v69
    %v74 = vsub.f32 %v72, %v70
    %vm75 = vcmp.ne.f32.partialorder %v69, 0.0
    %vm76 = vcmp.ne.f32.partialorder %v70, 0.0
    %v77 = vmul.f32 %v73, %v73
    %v78 = vmul.f32 %v74, %v74
    %v79 = vsel %vm75, %v77, 0.0
    %v80 = vsel %vm76, %v78, 0.0
    %s81 = sadd.s32 0, 0
    %s82 = sadd.s32 %s81, 1
    %s83 = smul.u32 %s82, 16
    %p84 = scmp.gt.s32.totalorder %s83, 16
    %p85 = scmp.le.s32.totalorder %s83, 16
    // Predicated region
    $region22: #{tpu_custom_call.1} parent=1 // pred_check
      %p86 = pneg %p85
    $region23: #{tpu_custom_call.1} parent=1 // pred_check_branch
      %88 = sbr.rel (%p86) target = $region25
    $region24: #{tpu_custom_call.1} parent=1 // pred_region
      %v89 = vld [vmem:[#allocation2] sm:$0xff]
      %v90 = vadd.f32 %v79, %v80
      %v91 = vadd.f32 %v89, %v90
      %92 = vst [vmem:[#allocation2] sm:$0xff] %v91
    $region25: #{tpu_custom_call.1} parent=1 // pred_fallthru
      _
    // Predicated region
    $region26: #{tpu_custom_call.1} parent=1 // pred_check
      %p93 = pneg %p84
    $region27: #{tpu_custom_call.1} parent=1 // pred_check_branch
      %95 = sbr.rel (%p93) target = $region29
    $region28: #{tpu_custom_call.1} parent=1 // pred_region
      %v96 = vlaneseq
      %v97 = vshrl.u32 %v96, 7
      %v98 = vadd.s32 %v97, 8
      %s99 = smul.u32 %s81, 16
      %v100 = vstv %s99
      %v101 = vadd.s32 %v100, %v97
      %v102 = vadd.s32 %v100, %v98
      %vm103 = vcmp.lt.s32.totalorder %v101, 16
      %vm104 = vcmp.lt.s32.totalorder %v102, 16
      %v105 = vld [vmem:[#allocation2] sm:$0xff]
      %v106 = vsel %vm103, %v79, 0.0
      %v107 = vsel %vm104, %v80, 0.0
      %v108 = vadd.f32 %v106, %v107
      %v109 = vadd.f32 %v105, %v108
      %110 = vst [vmem:[#allocation2] sm:$0xff] %v109
    $region29: #{tpu_custom_call.1} parent=1 // pred_fallthru
      _
    // Predicated region
    $region30: #{tpu_custom_call.1} parent=1 // pred_check
      %p111 = pneg %p64
    $region31: #{tpu_custom_call.1} parent=1 // pred_check_branch
      %113 = sbr.rel (%p111) target = $region33
    $region32: #{tpu_custom_call.1} parent=1 // pred_region
      %v114 = vld [vmem:[#allocation2] sm:$0xff]
      %115 = vst [vmem:[#allocation8] sm:$0xff] %v114
    $region33: #{tpu_custom_call.1} parent=1 // pred_fallthru
      _
    // Predicated region
    $region34: #{tpu_custom_call.1} parent=1 // pred_check
      _
    $region35: #{tpu_custom_call.1} parent=1 // pred_check_branch
      %117 = sbr.rel (0) target = $region37
    $region36: #{tpu_custom_call.1} parent=1 // pred_region
      %119 = vsyncadd [#allocation5], 0
      %s121 = sshll.u32 [#allocation8], 4
      %s122 = int_to_ptr.vmem [resolvable:$true] %s121
      %s123 = sshll.u32 %s2, 4
      %s124 = int_to_ptr.hbm [resolvable:$true] %s123
      %126 = dma.vmem_to_hbm [thread:$0]  %s122, 128, %s124, [#allocation5]
    $region37: #{tpu_custom_call.1} parent=1 // pred_fallthru
      _
    // Predicated region
    $region38: #{tpu_custom_call.1} parent=1 // pred_check
      _
    $region39: #{tpu_custom_call.1} parent=1 // pred_check_branch
      %128 = sbr.rel (0) target = $region41
    $region40: #{tpu_custom_call.1} parent=1 // pred_region
      %130 = dma.done [#allocation5], 128
    $region41: #{tpu_custom_call.1} parent=1 // pred_fallthru
      _
    %131 = vsyncpa [#allocation4], 1
    %132 = vsyncpa [#allocation7], 1
    %133 = vsyncpa [#allocation5], 1

</llo_original>
